<compile_context>
chip_gen: v7x
topology: tpu7x:2x2x1
jax: 0.10.0
libtpu: 0.0.40
codegen_flags: <defaults>
</compile_context>

<pallas_src>
import math
import jax
import jax.numpy as jnp
from jax.experimental import pallas as pl
from jax.experimental.pallas import tpu as pltpu

NEG_SLOPE = 0.01   # nn.LeakyReLU default
BN_EPS = 1e-5      # nn.BatchNorm1d default
L2_EPS = 1e-12     # F.normalize default


# ---------------------------------------------------------------- fused Pallas kernel

def _make_fused_kernel(num_repeats, mm_dtype):
    """Kernel refs: x, [Wfirst_r, W2_r] * num_repeats, vec_table, out.

    vec_table rows (f32), 4 per repeat:
      row 4r+0 : b1   (folded BN1 bias; for r>0 also includes the folded decoder bias)
      row 4r+1 : b2
      row 4r+2 : s2   (extra_batch BN scale)
      row 4r+3 : t2   (extra_batch BN shift)
    """

    def kernel(x_ref, *refs):
        o_ref = refs[-1]
        vec_ref = refs[-2]

        x = x_ref[...]                                   # f32 activations
        for r in range(num_repeats):                     # static unroll
            w1_ref = refs[2 * r]
            w2_ref = refs[2 * r + 1]
            b1 = vec_ref[4 * r + 0:4 * r + 1, :]
            b2 = vec_ref[4 * r + 1:4 * r + 2, :]
            s2 = vec_ref[4 * r + 2:4 * r + 3, :]
            t2 = vec_ref[4 * r + 3:4 * r + 4, :]

            # first Linear (BN1 folded; for r>0 the decoder Linear is folded in too)
            h = jnp.dot(x.astype(mm_dtype), w1_ref[...],
                        preferred_element_type=jnp.float32) + b1
            h = jnp.maximum(h, 0.0)                      # ReLU (f32, VPU)

            # output Linear
            o = jnp.dot(h.astype(mm_dtype), w2_ref[...],
                        preferred_element_type=jnp.float32) + b2

            # F.normalize(dim=-1): o / max(||o||, eps) == o * rsqrt(max(sum(o^2), eps^2))
            ss = jnp.sum(o * o, axis=-1, keepdims=True)
            o = o * jax.lax.rsqrt(jnp.maximum(ss, L2_EPS * L2_EPS))

            # extra_batch BatchNorm (eval mode, folded to per-feature scale/shift)
            x = o * s2 + t2

            if r != num_repeats - 1:
                # E_C_repeated inter-encoder step (decoder matmul already folded away)
                x = jnp.where(x >= 0, x, NEG_SLOPE * x)          # LeakyReLU
                ax = jnp.abs(x)
                xmax = jnp.max(ax, axis=-1, keepdims=True)
                # |x| / max|x|  (no eps clamp, matching torch; rows cannot be all-zero
                # after the L2-normalized encoder output). Divide -> EUP reciprocal.
                x = ax * pl.reciprocal(xmax, approx=False)

        o_ref[...] = x.astype(o_ref.dtype)

    return kernel


# ---------------------------------------------------------------- parameter packing

def build_fused_params(enc_params, dec_params, mm_dtype=jnp.bfloat16):
    """Fold decoder Linear into each non-first encoder's first Linear; pack vectors.

    Returns (mats, vec_table):
      mats      : [W1_0, W2_0, Wc_1, W2_1, ...] in mm_dtype (MXU operands)
      vec_table : (4*num_repeats, 128) f32 table of biases / BN scale+shift
    """
    mats, vec_rows = [], []
    for r, p in enumerate(enc_params):
        if r == 0:
            w1, b1 = p["w1"], p["b1"]
        else:
            # x_next = (xn @ Wd + bd) @ W1f + b1f == xn @ (Wd @ W1f) + (bd @ W1f + b1f)
            w1 = dec_params["w"] @ p["w1"]
            b1 = dec_params["b"] @ p["w1"] + p["b1"]
        mats.append(w1.astype(mm_dtype))
        mats.append(p["w2"].astype(mm_dtype))
        vec_rows += [b1, p["b2"], p["s2"], p["t2"]]
    vec_table = jnp.concatenate(vec_rows, axis=0).astype(jnp.float32)
    return mats, vec_table


def _pick_tile_b(B):
    """Biggest batch tile <= 512 that is a multiple of 8 and divides B, preferring
    >= 2 grid steps (so both v7x TensorCores get work)."""
    if B % 8 != 0:
        return B                                   # full-block fallback
    candidates = [t for t in (512, 256, 128, 64, 32, 16, 8) if t <= B and B % t == 0]
    for t in candidates:
        if B // t >= 2:
            return t
    return candidates[0] if candidates else B


def e_c_repeated_forward(x, enc_params, dec_params, *, tile_b=None,
                         mm_dtype=jnp.bfloat16):
    """Single fused pallas_call for the whole encoder/decoder chain."""
    B, din = x.shape
    n = len(enc_params)
    dout = enc_params[-1]["w2"].shape[1]

    mats, vec_table = build_fused_params(enc_params, dec_params, mm_dtype)

    if tile_b is None:
        tile_b = _pick_tile_b(B)
    assert tile_b == B or (B % tile_b == 0 and tile_b % 8 == 0)
    grid = (B // tile_b,)

    x_spec = pl.BlockSpec((tile_b, din), lambda i: (i, 0))
    out_spec = pl.BlockSpec((tile_b, dout), lambda i: (i, 0))
    # Full-array blocks with a constant index map: weights stay resident in VMEM
    # across batch-grid steps (no re-DMA).
    mat_specs = [pl.BlockSpec(m.shape, lambda i: (0, 0)) for m in mats]
    vec_spec = pl.BlockSpec(vec_table.shape, lambda i: (0, 0))

    return pl.pallas_call(
        _make_fused_kernel(n, mm_dtype),
        out_shape=jax.ShapeDtypeStruct((B, dout), jnp.float32),
        grid_spec=pltpu.PrefetchScalarGridSpec(
            num_scalar_prefetch=0,
            grid=grid,
            in_specs=[x_spec] + mat_specs + [vec_spec],
            out_specs=out_spec,
        ),
        compiler_params=pltpu.CompilerParams(
            dimension_semantics=("parallel",)),
    )(x, *mats, vec_table)


# ---------------------------------------------------------------- parameter init

def _linear_init(key, fan_in, fan_out):
    kw, kb = jax.random.split(key)
    bound = 1.0 / math.sqrt(fan_in)
    w = jax.random.uniform(kw, (fan_in, fan_out), jnp.float32, -bound, bound)
    b = jax.random.uniform(kb, (1, fan_out), jnp.float32, -bound, bound)
    return w, b


def _bn_fold(dim, gamma=None, beta=None, rmean=None, rvar=None):
    """Fold BatchNorm1d (eval mode) into per-feature scale/shift."""
    gamma = jnp.ones((1, dim), jnp.float32) if gamma is None else gamma
    beta = jnp.zeros((1, dim), jnp.float32) if beta is None else beta
    rmean = jnp.zeros((1, dim), jnp.float32) if rmean is None else rmean
    rvar = jnp.ones((1, dim), jnp.float32) if rvar is None else rvar
    scale = gamma / jnp.sqrt(rvar + BN_EPS)
    shift = beta - rmean * scale
    return scale, shift


def make_encoder_params(key, din, dh, dout):
    k1, k2 = jax.random.split(key)
    w1, b1 = _linear_init(k1, din, dh)
    s1, t1 = _bn_fold(dh)                 # BN after first Linear
    # Fold BN1 into the first Linear:  (x@w1 + b1)*s1 + t1 == x@(w1*s1) + (b1*s1 + t1)
    w1f = w1 * s1
    b1f = b1 * s1 + t1
    w2, b2 = _linear_init(k2, dh, dout)
    s2, t2 = _bn_fold(dout)               # extra_batch BN (after L2-norm; cannot fold)
    return dict(w1=w1f, b1=b1f, w2=w2, b2=b2, s2=s2, t2=t2)


# ---------------------------------------------------------------- references

def _forward_ref_fused(x, mats, vec_table, num_repeats, mm_dtype):
    """Pure-JAX reference with identical (folded / bf16-operand) numerics."""
    for r in range(num_repeats):
        w1, w2 = mats[2 * r], mats[2 * r + 1]
        b1 = vec_table[4 * r + 0:4 * r + 1, :]
        b2 = vec_table[4 * r + 1:4 * r + 2, :]
        s2 = vec_table[4 * r + 2:4 * r + 3, :]
        t2 = vec_table[4 * r + 3:4 * r + 4, :]
        h = jnp.maximum(jnp.dot(x.astype(mm_dtype), w1,
                                preferred_element_type=jnp.float32) + b1, 0.0)
        o = jnp.dot(h.astype(mm_dtype), w2,
                    preferred_element_type=jnp.float32) + b2
        o = o / jnp.maximum(jnp.sqrt(jnp.sum(o * o, -1, keepdims=True)), L2_EPS)
        x = o * s2 + t2
        if r != num_repeats - 1:
            x = jnp.where(x >= 0, x, NEG_SLOPE * x)
            ax = jnp.abs(x)
            x = ax / jnp.max(ax, -1, keepdims=True)
    return x


def _encoder_ref(x, p):
    h = jnp.maximum(x @ p["w1"] + p["b1"], 0.0)
    o = h @ p["w2"] + p["b2"]
    o = o / jnp.maximum(jnp.sqrt(jnp.sum(o * o, -1, keepdims=True)), L2_EPS)
    return o * p["s2"] + p["t2"]


def _decoder_ref(x, p):
    x = jnp.where(x >= 0, x, NEG_SLOPE * x)
    ax = jnp.abs(x)
    xn = ax / jnp.max(ax, -1, keepdims=True)
    return xn @ p["w"] + p["b"]


def _forward_ref_original(x, enc_params, dec_params):
    """Unfolded f32 reference matching the PyTorch module structure exactly."""
    n = len(enc_params)
    for i in range(n):
        x = _encoder_ref(x, enc_params[i])
        if i != n - 1:
            x = _decoder_ref(x, dec_params)
    return x


# ---------------------------------------------------------------- main

if __name__ == "__main__":
    B = 16
    IN_DIM, HID_DIM, OUT_DIM = 64, 64, 64          # wrapper doubles: 128 features
    DIN, DH, DOUT = 2 * IN_DIM, 2 * HID_DIM, 2 * OUT_DIM
    NUM_REPEATS = 2
    MM_DTYPE = jnp.bfloat16                        # MXU operand dtype (f32 accumulate)

    key = jax.random.PRNGKey(0)
    kx, kd, ke0, ke1 = jax.random.split(key, 4)

    x = jax.random.normal(kx, (B, DIN), jnp.float32)

    enc_params = [make_encoder_params(ke0, DIN, DH, DOUT),
                  make_encoder_params(ke1, DIN, DH, DOUT)]
    wd, bd = _linear_init(kd, DOUT, DIN)
    dec_params = dict(w=wd, b=bd)

    out = e_c_repeated_forward(x, enc_params, dec_params, mm_dtype=MM_DTYPE)
    out = jax.block_until_ready(out)

    # 1) tight check against a pure-JAX reference with identical folded/bf16 numerics
    mats, vec_table = build_fused_params(enc_params, dec_params, MM_DTYPE)
    ref_fused = _forward_ref_fused(x, mats, vec_table, NUM_REPEATS, MM_DTYPE)
    if not jnp.allclose(out, ref_fused, atol=1e-3, rtol=1e-3):
        raise AssertionError("Pallas output mismatch vs matched-numerics reference")

    # 2) loose check against the full-precision, unfolded reference (semantics check;
    #    slack covers bf16 matmul operands + decoder folding rounding)
    ref_f32 = _forward_ref_original(x, enc_params, dec_params)
    if not jnp.allclose(out, ref_f32, atol=5e-2, rtol=0.0):
        raise AssertionError("Pallas output mismatch vs full-precision reference")

    print("KERNEL_OK")
</pallas_src>

<mosaic_0001>
module attributes {stable_mosaic.version = 11 : i64} {
  func.func @kernel(%arg0: i32, %arg1: memref<8x128xf32, #tpu.memory_space<vmem>>, %arg2: memref<128x128xbf16, #tpu.memory_space<vmem>>, %arg3: memref<128x128xbf16, #tpu.memory_space<vmem>>, %arg4: memref<128x128xbf16, #tpu.memory_space<vmem>>, %arg5: memref<128x128xbf16, #tpu.memory_space<vmem>>, %arg6: memref<8x128xf32, #tpu.memory_space<vmem>>, %arg7: memref<8x128xf32, #tpu.memory_space<vmem>>) attributes {dimension_semantics = [#tpu.dimension_semantics<parallel>], iteration_bounds = array<i64: 2>, scalar_prefetch = 0 : i64, scratch_operands = 0 : i64, tpu.core_type = #tpu.core_type<tc>, window_params = [{transform_indices = @transform_0, window_bounds = array<i64: 8, 128>}, {pipeline_mode = #tpu.pipeline_mode<synchronous>, transform_indices = @transform_1, window_bounds = array<i64: 128, 128>}, {pipeline_mode = #tpu.pipeline_mode<synchronous>, transform_indices = @transform_2, window_bounds = array<i64: 128, 128>}, {pipeline_mode = #tpu.pipeline_mode<synchronous>, transform_indices = @transform_3, window_bounds = array<i64: 128, 128>}, {pipeline_mode = #tpu.pipeline_mode<synchronous>, transform_indices = @transform_4, window_bounds = array<i64: 128, 128>}, {pipeline_mode = #tpu.pipeline_mode<synchronous>, transform_indices = @transform_5, window_bounds = array<i64: 8, 128>}, {transform_indices = @transform_6, window_bounds = array<i64: 8, 128>}]} {
    %c0 = arith.constant 0 : index
    %c0_0 = arith.constant 0 : index
    %0 = vector.load %arg1[%c0, %c0_0] : memref<8x128xf32, #tpu.memory_space<vmem>>, vector<8x128xf32>
    %c0_1 = arith.constant 0 : index
    %c0_2 = arith.constant 0 : index
    %1 = vector.load %arg6[%c0_1, %c0_2] : memref<8x128xf32, #tpu.memory_space<vmem>>, vector<1x128xf32>
    %c1 = arith.constant 1 : index
    %c0_3 = arith.constant 0 : index
    %2 = vector.load %arg6[%c1, %c0_3] : memref<8x128xf32, #tpu.memory_space<vmem>>, vector<1x128xf32>
    %c2 = arith.constant 2 : index
    %c0_4 = arith.constant 0 : index
    %3 = vector.load %arg6[%c2, %c0_4] : memref<8x128xf32, #tpu.memory_space<vmem>>, vector<1x128xf32>
    %c3 = arith.constant 3 : index
    %c0_5 = arith.constant 0 : index
    %4 = vector.load %arg6[%c3, %c0_5] : memref<8x128xf32, #tpu.memory_space<vmem>>, vector<1x128xf32>
    %5 = arith.truncf %0 : vector<8x128xf32> to vector<8x128xbf16>
    %c0_6 = arith.constant 0 : index
    %c0_7 = arith.constant 0 : index
    %6 = vector.load %arg2[%c0_6, %c0_7] : memref<128x128xbf16, #tpu.memory_space<vmem>>, vector<128x128xbf16>
    %cst = arith.constant dense<0.000000e+00> : vector<8x128xf32>
    %7 = tpu.matmul %5, %6, %cst {dimension_numbers = #tpu.dot_dimension_numbers<[1], [0], [0], [1], [0, 0, 1, 1], [], []>} : vector<8x128xbf16>, vector<128x128xbf16>, vector<8x128xf32> -> vector<8x128xf32>
    %8 = vector.broadcast %1 : vector<1x128xf32> to vector<8x128xf32>
    %9 = arith.addf %7, %8 : vector<8x128xf32>
    %cst_8 = arith.constant 0.000000e+00 : f32
    %10 = vector.broadcast %cst_8 : f32 to vector<8x128xf32>
    %11 = arith.maximumf %9, %10 : vector<8x128xf32>
    %12 = arith.truncf %11 : vector<8x128xf32> to vector<8x128xbf16>
    %c0_9 = arith.constant 0 : index
    %c0_10 = arith.constant 0 : index
    %13 = vector.load %arg3[%c0_9, %c0_10] : memref<128x128xbf16, #tpu.memory_space<vmem>>, vector<128x128xbf16>
    %cst_11 = arith.constant dense<0.000000e+00> : vector<8x128xf32>
    %14 = tpu.matmul %12, %13, %cst_11 {dimension_numbers = #tpu.dot_dimension_numbers<[1], [0], [0], [1], [0, 0, 1, 1], [], []>} : vector<8x128xbf16>, vector<128x128xbf16>, vector<8x128xf32> -> vector<8x128xf32>
    %15 = vector.broadcast %2 : vector<1x128xf32> to vector<8x128xf32>
    %16 = arith.addf %14, %15 : vector<8x128xf32>
    %17 = arith.mulf %16, %16 : vector<8x128xf32>
    %cst_12 = arith.constant dense<0.000000e+00> : vector<8xf32>
    %18 = vector.multi_reduction <add>, %17, %cst_12 [1] : vector<8x128xf32> to vector<8xf32>
    %19 = vector.shape_cast %18 : vector<8xf32> to vector<8x1xf32>
    %cst_13 = arith.constant 1.000000e-24 : f32
    %20 = vector.broadcast %cst_13 : f32 to vector<8x1xf32>
    %21 = arith.maximumf %19, %20 : vector<8x1xf32>
    %22 = math.rsqrt %21 : vector<8x1xf32>
    %23 = vector.broadcast %22 : vector<8x1xf32> to vector<8x128xf32>
    %24 = arith.mulf %16, %23 : vector<8x128xf32>
    %25 = vector.broadcast %3 : vector<1x128xf32> to vector<8x128xf32>
    %26 = arith.mulf %24, %25 : vector<8x128xf32>
    %27 = vector.broadcast %4 : vector<1x128xf32> to vector<8x128xf32>
    %28 = arith.addf %26, %27 : vector<8x128xf32>
    %cst_14 = arith.constant 0.000000e+00 : f32
    %29 = vector.broadcast %cst_14 : f32 to vector<8x128xf32>
    %30 = arith.cmpf oge, %28, %29 : vector<8x128xf32>
    %cst_15 = arith.constant 0.00999999977 : f32
    %31 = vector.broadcast %cst_15 : f32 to vector<8x128xf32>
    %32 = arith.mulf %31, %28 : vector<8x128xf32>
    %33 = arith.select %30, %28, %32 : vector<8x128xi1>, vector<8x128xf32>
    %34 = math.absf %33 : vector<8x128xf32>
    %cst_16 = arith.constant dense<0xFF800000> : vector<8xf32>
    %35 = vector.multi_reduction <maximumf>, %34, %cst_16 [1] : vector<8x128xf32> to vector<8xf32>
    %36 = vector.shape_cast %35 : vector<8xf32> to vector<8x1xf32>
    %37 = tpu.reciprocal %36 : vector<8x1xf32> -> vector<8x1xf32>
    %38 = vector.broadcast %37 : vector<8x1xf32> to vector<8x128xf32>
    %39 = arith.mulf %34, %38 : vector<8x128xf32>
    %c4 = arith.constant 4 : index
    %c0_17 = arith.constant 0 : index
    %40 = vector.load %arg6[%c4, %c0_17] : memref<8x128xf32, #tpu.memory_space<vmem>>, vector<1x128xf32>
    %c5 = arith.constant 5 : index
    %c0_18 = arith.constant 0 : index
    %41 = vector.load %arg6[%c5, %c0_18] : memref<8x128xf32, #tpu.memory_space<vmem>>, vector<1x128xf32>
    %c6 = arith.constant 6 : index
    %c0_19 = arith.constant 0 : index
    %42 = vector.load %arg6[%c6, %c0_19] : memref<8x128xf32, #tpu.memory_space<vmem>>, vector<1x128xf32>
    %c7 = arith.constant 7 : index
    %c0_20 = arith.constant 0 : index
    %43 = vector.load %arg6[%c7, %c0_20] : memref<8x128xf32, #tpu.memory_space<vmem>>, vector<1x128xf32>
    %44 = arith.truncf %39 : vector<8x128xf32> to vector<8x128xbf16>
    %c0_21 = arith.constant 0 : index
    %c0_22 = arith.constant 0 : index
    %45 = vector.load %arg4[%c0_21, %c0_22] : memref<128x128xbf16, #tpu.memory_space<vmem>>, vector<128x128xbf16>
    %cst_23 = arith.constant dense<0.000000e+00> : vector<8x128xf32>
    %46 = tpu.matmul %44, %45, %cst_23 {dimension_numbers = #tpu.dot_dimension_numbers<[1], [0], [0], [1], [0, 0, 1, 1], [], []>} : vector<8x128xbf16>, vector<128x128xbf16>, vector<8x128xf32> -> vector<8x128xf32>
    %47 = vector.broadcast %40 : vector<1x128xf32> to vector<8x128xf32>
    %48 = arith.addf %46, %47 : vector<8x128xf32>
    %cst_24 = arith.constant 0.000000e+00 : f32
    %49 = vector.broadcast %cst_24 : f32 to vector<8x128xf32>
    %50 = arith.maximumf %48, %49 : vector<8x128xf32>
    %51 = arith.truncf %50 : vector<8x128xf32> to vector<8x128xbf16>
    %c0_25 = arith.constant 0 : index
    %c0_26 = arith.constant 0 : index
    %52 = vector.load %arg5[%c0_25, %c0_26] : memref<128x128xbf16, #tpu.memory_space<vmem>>, vector<128x128xbf16>
    %cst_27 = arith.constant dense<0.000000e+00> : vector<8x128xf32>
    %53 = tpu.matmul %51, %52, %cst_27 {dimension_numbers = #tpu.dot_dimension_numbers<[1], [0], [0], [1], [0, 0, 1, 1], [], []>} : vector<8x128xbf16>, vector<128x128xbf16>, vector<8x128xf32> -> vector<8x128xf32>
    %54 = vector.broadcast %41 : vector<1x128xf32> to vector<8x128xf32>
    %55 = arith.addf %53, %54 : vector<8x128xf32>
    %56 = arith.mulf %55, %55 : vector<8x128xf32>
    %cst_28 = arith.constant dense<0.000000e+00> : vector<8xf32>
    %57 = vector.multi_reduction <add>, %56, %cst_28 [1] : vector<8x128xf32> to vector<8xf32>
    %58 = vector.shape_cast %57 : vector<8xf32> to vector<8x1xf32>
    %cst_29 = arith.constant 1.000000e-24 : f32
    %59 = vector.broadcast %cst_29 : f32 to vector<8x1xf32>
    %60 = arith.maximumf %58, %59 : vector<8x1xf32>
    %61 = math.rsqrt %60 : vector<8x1xf32>
    %62 = vector.broadcast %61 : vector<8x1xf32> to vector<8x128xf32>
    %63 = arith.mulf %55, %62 : vector<8x128xf32>
    %64 = vector.broadcast %42 : vector<1x128xf32> to vector<8x128xf32>
    %65 = arith.mulf %63, %64 : vector<8x128xf32>
    %66 = vector.broadcast %43 : vector<1x128xf32> to vector<8x128xf32>
    %67 = arith.addf %65, %66 : vector<8x128xf32>
    %c0_30 = arith.constant 0 : index
    %c0_31 = arith.constant 0 : index
    %68 = vector.load %arg7[%c0_30, %c0_31] : memref<8x128xf32, #tpu.memory_space<vmem>>, vector<8x128xf32>
    tpu.vector_store %arg7[%c0_30, %c0_31], %67 {strides = array<i32>} : memref<8x128xf32, #tpu.memory_space<vmem>>, vector<8x128xf32>,
    return
  }
  func.func @transform_0(%arg0: i32) -> (i32, i32) {
    %c0_i32 = arith.constant 0 : i32
    %c0_i32_0 = arith.constant 0 : i32
    return %arg0, %c0_i32 : i32, i32
  }
  func.func @transform_1(%arg0: i32) -> (i32, i32) {
    %c0_i32 = arith.constant 0 : i32
    %c0_i32_0 = arith.constant 0 : i32
    %c0_i32_1 = arith.constant 0 : i32
    return %c0_i32, %c0_i32_0 : i32, i32
  }
  func.func @transform_2(%arg0: i32) -> (i32, i32) {
    %c0_i32 = arith.constant 0 : i32
    %c0_i32_0 = arith.constant 0 : i32
    %c0_i32_1 = arith.constant 0 : i32
    return %c0_i32, %c0_i32_0 : i32, i32
  }
  func.func @transform_3(%arg0: i32) -> (i32, i32) {
    %c0_i32 = arith.constant 0 : i32
    %c0_i32_0 = arith.constant 0 : i32
    %c0_i32_1 = arith.constant 0 : i32
    return %c0_i32, %c0_i32_0 : i32, i32
  }
  func.func @transform_4(%arg0: i32) -> (i32, i32) {
    %c0_i32 = arith.constant 0 : i32
    %c0_i32_0 = arith.constant 0 : i32
    %c0_i32_1 = arith.constant 0 : i32
    return %c0_i32, %c0_i32_0 : i32, i32
  }
  func.func @transform_5(%arg0: i32) -> (i32, i32) {
    %c0_i32 = arith.constant 0 : i32
    %c0_i32_0 = arith.constant 0 : i32
    %c0_i32_1 = arith.constant 0 : i32
    return %c0_i32, %c0_i32_0 : i32, i32
  }
  func.func @transform_6(%arg0: i32) -> (i32, i32) {
    %c0_i32 = arith.constant 0 : i32
    %c0_i32_0 = arith.constant 0 : i32
    return %arg0, %c0_i32 : i32, i32
  }
}

</mosaic_0001>

<llo_original>
// kernel: tpu_custom_call.1
$region0: #{tpu_custom_call.1}
  #allocation0 [shape = 'u32[]', space=smem, size = 0x4, offset = 0x4, fixed_abs, tag = 'smem constant byte address 0x4 - core index']
  #allocation1 [shape = 'u32[144,128]{1,0:T(1,128)}', space=vmem, size = 0x12000, scoped, tag = 'internal scratch']
  %s0 = inlined_call_operand.hbm [shape: f32[16,128], index: 0, kind: input, shape index: {}]
  %s1 = inlined_call_operand.hbm [shape: bf16[128,128], index: 1, kind: input, shape index: {}]
  %s2 = inlined_call_operand.hbm [shape: bf16[128,128], index: 2, kind: input, shape index: {}]
  %s3 = inlined_call_operand.hbm [shape: bf16[128,128], index: 3, kind: input, shape index: {}]
  %s4 = inlined_call_operand.hbm [shape: bf16[128,128], index: 4, kind: input, shape index: {}]
  %s5 = inlined_call_operand.vmem [shape: f32[8,128], index: 5, kind: input, shape index: {}]
  %s6 = inlined_call_operand.hbm [shape: f32[16,128], index: 6, kind: output, shape index: {}]
  %s7 = sld [smem:[#allocation0]]
  $region77: #{tpu_custom_call.1} parent=0
    _
  %s9 = ssub.s32 1, %s7
  %s10 = scalar_select 0, %s9, %s7
  $region1: #{tpu_custom_call.1} parent=0
    #allocation2 [shape = 'u8[8192]{0}', space=vmem, size = 0x2000, scoped, tag = 'input window, operand 0']
    #allocation3 [shape = 's32[2]{0}', space=sflag, size = 0x8, scoped, tag = 'scoped memory for tpu_custom_call.1']
    #allocation4 [shape = 's32[2]{0}', space=sflag, size = 0x8, scoped, tag = 'scoped memory for tpu_custom_call.1']
    #allocation5 [shape = 'u8[32768]{0}', space=vmem, size = 0x8000, scoped, tag = 'input window, operand 1, single buffered']
    #allocation6 [shape = 's32[1]{0}', space=sflag, size = 0x4, scoped, tag = 'scoped memory for tpu_custom_call.1']
    #allocation7 [shape = 'u8[32768]{0}', space=vmem, size = 0x8000, scoped, tag = 'input window, operand 2, single buffered']
    #allocation8 [shape = 'u8[32768]{0}', space=vmem, size = 0x8000, scoped, tag = 'input window, operand 3, single buffered']
    #allocation9 [shape = 's32[1]{0}', space=sflag, size = 0x4, scoped, tag = 'scoped memory for tpu_custom_call.1']
    #allocation10 [shape = 'u8[32768]{0}', space=vmem, size = 0x8000, scoped, tag = 'input window, operand 4, single buffered']
    #allocation11 [shape = 'u8[8192]{0}', space=vmem, size = 0x2000, scoped, tag = 'output window, operand 0']
    %11 = vsyncpa [#allocation3], 0
    %s12 = scalar_lea.sflag [#allocation3], 1
    %13 = vsyncpa %s12, 0
    %14 = vsyncpa [#allocation6], 0
    %15 = vsyncpa [#allocation9], 0
    %16 = vsyncpa [#allocation4], 0
    %s17 = scalar_lea.sflag [#allocation4], 1
    %18 = vsyncpa %s17, 0
    loop: start=0, step=1, limit=4
    $region2: #{tpu_custom_call.1} parent=1 // loop_pre_header
      _
    $region3: #{tpu_custom_call.1} parent=1 // loop_header
      %s20 = sphi 0, %s24
      %p21 = scmp.ge.s32.totalorder %s20, 4
      %s30 = sphi 0, %s32
      %s33 = sphi 0, %s30
      %s34 = sphi 0, %s33
      %s50 = sphi 0, %s34
      %s54 = sphi 0, %s54
      %s56 = sphi 0, %s54
      %s57 = sphi 0, %s56
      %s71 = sphi 0, %s57
      %s75 = sphi 0, %s75
      %s77 = sphi 0, %s75
      %s78 = sphi 0, %s77
      %s92 = sphi 0, %s78
      %s96 = sphi 0, %s96
      %s98 = sphi 0, %s96
      %s99 = sphi 0, %s98
      %s113 = sphi 0, %s99
      %s117 = sphi 0, %s117
      %s119 = sphi 0, %s117
      %s120 = sphi 0, %s119
      %s134 = sphi 0, %s120
      %s138 = sphi 0, %s138
      %s140 = sphi 0, %s138
      %s141 = sphi 0, %s140
      %s155 = sphi 0, %s141
      %s161 = sphi 0, %s163
      %s164 = sphi 0, %s161
      %s165 = sphi 0, %s164
      %s181 = sphi 0, %s165
    $region4: #{tpu_custom_call.1} parent=1 // loop_header_branch
      %23 = sbr.rel (%p21) target = $region8
    $region5: #{tpu_custom_call.1} parent=1 // loop_body
      %s25 = ssub.s32 %s20, 1
      %s26 = ssub.s32 %s20, 2
      %s27 = sadd.s32 %s20, 1
      %s28 = ssub.s32 %s20, %s27
      %p29 = scmp.eq.s32.totalorder %s28, 0
      %s31 = sadd.s32 %s30, 1
      %s32 = scalar_select %p29, %s30, %s31
      %p35 = pneg %p29
      %p36 = scmp.eq.s32.totalorder %s20, 1
      %p37 = por %p35, %p36
      %p38 = scmp.ne.s32.totalorder %s30, %s33
      %p39 = scmp.eq.s32.totalorder %s20, 0
      %p40 = por %p38, %p39
      %p41 = scmp.ne.s32.totalorder %s30, %s33
      %p42 = scmp.eq.s32.totalorder %s25, 1
      %p43 = por %p41, %p42
      %p44 = scmp.ne.s32.totalorder %s33, %s34
      %p45 = scmp.eq.s32.totalorder %s25, 0
      %p46 = por %p44, %p45
      %p47 = scmp.ne.s32.totalorder %s33, %s34
      %p48 = scmp.eq.s32.totalorder %s26, 1
      %p49 = por %p47, %p48
      %p51 = scmp.ne.s32.totalorder %s34, %s50
      %p52 = scmp.eq.s32.totalorder %s26, 0
      %p53 = por %p51, %p52
      %s55 = sadd.s32 %s54, 1
      %p58 = scmp.eq.s32.totalorder %s20, 1
      %p59 = scmp.ne.s32.totalorder %s54, %s56
      %p60 = scmp.eq.s32.totalorder %s20, 0
      %p61 = por %p59, %p60
      %p62 = scmp.ne.s32.totalorder %s54, %s56
      %p63 = scmp.eq.s32.totalorder %s25, 1
      %p64 = por %p62, %p63
      %p65 = scmp.ne.s32.totalorder %s56, %s57
      %p66 = scmp.eq.s32.totalorder %s25, 0
      %p67 = por %p65, %p66
      %p68 = scmp.ne.s32.totalorder %s56, %s57
      %p69 = scmp.eq.s32.totalorder %s26, 1
      %p70 = por %p68, %p69
      %p72 = scmp.ne.s32.totalorder %s57, %s71
      %p73 = scmp.eq.s32.totalorder %s26, 0
      %p74 = por %p72, %p73
      %s76 = sadd.s32 %s75, 1
      %p79 = scmp.eq.s32.totalorder %s20, 1
      %p80 = scmp.ne.s32.totalorder %s75, %s77
      %p81 = scmp.eq.s32.totalorder %s20, 0
      %p82 = por %p80, %p81
      %p83 = scmp.ne.s32.totalorder %s75, %s77
      %p84 = scmp.eq.s32.totalorder %s25, 1
      %p85 = por %p83, %p84
      %p86 = scmp.ne.s32.totalorder %s77, %s78
      %p87 = scmp.eq.s32.totalorder %s25, 0
      %p88 = por %p86, %p87
      %p89 = scmp.ne.s32.totalorder %s77, %s78
      %p90 = scmp.eq.s32.totalorder %s26, 1
      %p91 = por %p89, %p90
      %p93 = scmp.ne.s32.totalorder %s78, %s92
      %p94 = scmp.eq.s32.totalorder %s26, 0
      %p95 = por %p93, %p94
      %s97 = sadd.s32 %s96, 1
      %p100 = scmp.eq.s32.totalorder %s20, 1
      %p101 = scmp.ne.s32.totalorder %s96, %s98
      %p102 = scmp.eq.s32.totalorder %s20, 0
      %p103 = por %p101, %p102
      %p104 = scmp.ne.s32.totalorder %s96, %s98
      %p105 = scmp.eq.s32.totalorder %s25, 1
      %p106 = por %p104, %p105
      %p107 = scmp.ne.s32.totalorder %s98, %s99
      %p108 = scmp.eq.s32.totalorder %s25, 0
      %p109 = por %p107, %p108
      %p110 = scmp.ne.s32.totalorder %s98, %s99
      %p111 = scmp.eq.s32.totalorder %s26, 1
      %p112 = por %p110, %p111
      %p114 = scmp.ne.s32.totalorder %s99, %s113
      %p115 = scmp.eq.s32.totalorder %s26, 0
      %p116 = por %p114, %p115
      %s118 = sadd.s32 %s117, 1
      %p121 = scmp.eq.s32.totalorder %s20, 1
      %p122 = scmp.ne.s32.totalorder %s117, %s119
      %p123 = scmp.eq.s32.totalorder %s20, 0
      %p124 = por %p122, %p123
      %p125 = scmp.ne.s32.totalorder %s117, %s119
      %p126 = scmp.eq.s32.totalorder %s25, 1
      %p127 = por %p125, %p126
      %p128 = scmp.ne.s32.totalorder %s119, %s120
      %p129 = scmp.eq.s32.totalorder %s25, 0
      %p130 = por %p128, %p129
      %p131 = scmp.ne.s32.totalorder %s119, %s120
      %p132 = scmp.eq.s32.totalorder %s26, 1
      %p133 = por %p131, %p132
      %p135 = scmp.ne.s32.totalorder %s120, %s134
      %p136 = scmp.eq.s32.totalorder %s26, 0
      %p137 = por %p135, %p136
      %s139 = sadd.s32 %s138, 1
      %p142 = scmp.eq.s32.totalorder %s20, 1
      %p143 = scmp.ne.s32.totalorder %s138, %s140
      %p144 = scmp.eq.s32.totalorder %s20, 0
      %p145 = por %p143, %p144
      %p146 = scmp.ne.s32.totalorder %s138, %s140
      %p147 = scmp.eq.s32.totalorder %s25, 1
      %p148 = por %p146, %p147
      %p149 = scmp.ne.s32.totalorder %s140, %s141
      %p150 = scmp.eq.s32.totalorder %s25, 0
      %p151 = por %p149, %p150
      %p152 = scmp.ne.s32.totalorder %s140, %s141
      %p153 = scmp.eq.s32.totalorder %s26, 1
      %p154 = por %p152, %p153
      %p156 = scmp.ne.s32.totalorder %s141, %s155
      %p157 = scmp.eq.s32.totalorder %s26, 0
      %p158 = por %p156, %p157
      %s159 = ssub.s32 %s20, %s27
      %p160 = scmp.eq.s32.totalorder %s159, 0
      %s162 = sadd.s32 %s161, 1
      %s163 = scalar_select %p160, %s161, %s162
      %p166 = pneg %p160
      %p167 = scmp.eq.s32.totalorder %s20, 1
      %p168 = por %p166, %p167
      %p169 = scmp.ne.s32.totalorder %s161, %s164
      %p170 = scmp.eq.s32.totalorder %s20, 0
      %p171 = por %p169, %p170
      %p172 = scmp.ne.s32.totalorder %s161, %s164
      %p173 = scmp.eq.s32.totalorder %s25, 1
      %p174 = por %p172, %p173
      %p175 = scmp.ne.s32.totalorder %s164, %s165
      %p176 = scmp.eq.s32.totalorder %s25, 0
      %p177 = por %p175, %p176
      %p178 = scmp.ne.s32.totalorder %s164, %s165
      %p179 = scmp.eq.s32.totalorder %s26, 1
      %p180 = por %p178, %p179
      %p182 = scmp.ne.s32.totalorder %s165, %s181
      %p183 = scmp.eq.s32.totalorder %s26, 0
      %p184 = por %p182, %p183
      %p185 = scmp.le.s32.totalorder 1, %s20
      %p186 = scmp.lt.s32.totalorder %s20, 3
      %p187 = pnand %p185, %p186
      %p188 = pneg %p187
      // Predicated region
      $region9: #{tpu_custom_call.1} parent=5 // pred_check
        _
      $region10: #{tpu_custom_call.1} parent=5 // pred_check_branch
        %190 = sbr.rel (%p187) target = $region12
      $region11: #{tpu_custom_call.1} parent=5 // pred_region
        %s191 = ssub.s32 %s20, 1
        // Predicated region
        $region13: #{tpu_custom_call.1} parent=11 // pred_check
          %p192 = pneg %p67
        $region14: #{tpu_custom_call.1} parent=11 // pred_check_branch
          %194 = sbr.rel (%p192) target = $region16
        $region15: #{tpu_custom_call.1} parent=11 // pred_region
          %s196 = ssub.s32 1024, 1024
          %197 = vsyncadd [#allocation6], %s196
          %s198 = sshll.u32 [#allocation5], 4
          %s199 = int_to_ptr.vmem [resolvable:$true] %s198
          %204 = dma.hbm_to_vmem [thread:$0]  %s1, 1024, %s199, [#allocation6], 64, 64, 4
        $region16: #{tpu_custom_call.1} parent=11 // pred_fallthru
          _
        // Predicated region
        $region17: #{tpu_custom_call.1} parent=11 // pred_check
          %p205 = pneg %p88
        $region18: #{tpu_custom_call.1} parent=11 // pred_check_branch
          %207 = sbr.rel (%p205) target = $region20
        $region19: #{tpu_custom_call.1} parent=11 // pred_region
          %s209 = ssub.s32 1024, 1024
          %210 = vsyncadd [#allocation6], %s209
          %s211 = sshll.u32 [#allocation7], 4
          %s212 = int_to_ptr.vmem [resolvable:$true] %s211
          %217 = dma.hbm_to_vmem [thread:$0]  %s2, 1024, %s212, [#allocation6], 64, 64, 4
        $region20: #{tpu_custom_call.1} parent=11 // pred_fallthru
          _
        // Predicated region
        $region21: #{tpu_custom_call.1} parent=11 // pred_check
          %p218 = pneg %p109
        $region22: #{tpu_custom_call.1} parent=11 // pred_check_branch
          %220 = sbr.rel (%p218) target = $region24
        $region23: #{tpu_custom_call.1} parent=11 // pred_region
          %s222 = ssub.s32 1024, 1024
          %223 = vsyncadd [#allocation9], %s222
          %s224 = sshll.u32 [#allocation8], 4
          %s225 = int_to_ptr.vmem [resolvable:$true] %s224
          %230 = dma.hbm_to_vmem [thread:$0]  %s3, 1024, %s225, [#allocation9], 64, 64, 4
        $region24: #{tpu_custom_call.1} parent=11 // pred_fallthru
          _
        // Predicated region
        $region25: #{tpu_custom_call.1} parent=11 // pred_check
          %p231 = pneg %p130
        $region26: #{tpu_custom_call.1} parent=11 // pred_check_branch
          %233 = sbr.rel (%p231) target = $region28
        $region27: #{tpu_custom_call.1} parent=11 // pred_region
          %s235 = ssub.s32 1024, 1024
          %236 = vsyncadd [#allocation9], %s235
          %s237 = sshll.u32 [#allocation10], 4
          %s238 = int_to_ptr.vmem [resolvable:$true] %s237
          %243 = dma.hbm_to_vmem [thread:$0]  %s4, 1024, %s238, [#allocation9], 64, 64, 4
        $region28: #{tpu_custom_call.1} parent=11 // pred_fallthru
          _
        // Predicated region
        $region29: #{tpu_custom_call.1} parent=11 // pred_check
          %p244 = pneg %p151
        $region30: #{tpu_custom_call.1} parent=11 // pred_check_branch
          %246 = sbr.rel (%p244) target = $region32
        $region31: #{tpu_custom_call.1} parent=11 // pred_region
          _
        $region32: #{tpu_custom_call.1} parent=11 // pred_fallthru
          _
      $region12: #{tpu_custom_call.1} parent=5 // pred_fallthru
        _
      %p247 = scmp.lt.s32.totalorder %s20, 2
      // Predicated region
      $region33: #{tpu_custom_call.1} parent=5 // pred_check
        %p248 = pneg %p247
      $region34: #{tpu_custom_call.1} parent=5 // pred_check_branch
        %250 = sbr.rel (%p248) target = $region36
      $region35: #{tpu_custom_call.1} parent=5 // pred_region
        // Predicated region
        $region37: #{tpu_custom_call.1} parent=35 // pred_check
          %p251 = pneg %p40
        $region38: #{tpu_custom_call.1} parent=35 // pred_check_branch
          %253 = sbr.rel (%p251) target = $region40
        $region39: #{tpu_custom_call.1} parent=35 // pred_region
          %s254 = sand.u32 %s30, 1
          %s255 = scalar_lea.sflag [#allocation3], %s254
          %s256 = sand.u32 %s30, 1
          %s257 = smul.addr %s256, 8
          %s258 = scalar_lea.vmem [#allocation2], %s257
          %s260 = ssub.s32 128, 128
          %261 = vsyncadd %s255, %s260
          %s262 = smul.addr %s20, 128
          %s263 = scalar_lea.hbm %s0, %s262
          %s265 = sshll.u32 %s258, 4
          %s266 = int_to_ptr.vmem [resolvable:$true] %s265
          %268 = dma.hbm_to_vmem [thread:$0]  %s263, 128, %s266, %s255
        $region40: #{tpu_custom_call.1} parent=35 // pred_fallthru
          _
      $region36: #{tpu_custom_call.1} parent=5 // pred_fallthru
        _
      %p269 = scmp.le.s32.totalorder 1, %s20
      %p270 = scmp.lt.s32.totalorder %s20, 3
      %p271 = pnand %p269, %p270
      %p272 = pneg %p271
      // Predicated region
      $region41: #{tpu_custom_call.1} parent=5 // pred_check
        _
      $region42: #{tpu_custom_call.1} parent=5 // pred_check_branch
        %274 = sbr.rel (%p271) target = $region44
      $region43: #{tpu_custom_call.1} parent=5 // pred_region
        %s275 = ssub.s32 %s20, 1
        %s276 = sand.u32 %s33, 1
        %s277 = scalar_lea.sflag [#allocation3], %s276
        %s278 = sand.u32 %s33, 1
        %s279 = smul.addr %s278, 8
        %s280 = scalar_lea.vmem [#allocation2], %s279
        // Predicated region
        $region45: #{tpu_custom_call.1} parent=43 // pred_check
          %p281 = pneg %p46
        $region46: #{tpu_custom_call.1} parent=43 // pred_check_branch
          %283 = sbr.rel (%p281) target = $region48
        $region47: #{tpu_custom_call.1} parent=43 // pred_region
          %284 = dma.done %s277, 128
        $region48: #{tpu_custom_call.1} parent=43 // pred_fallthru
          _
        // Predicated region
        $region49: #{tpu_custom_call.1} parent=43 // pred_check
          %p285 = pneg %p67
        $region50: #{tpu_custom_call.1} parent=43 // pred_check_branch
          %287 = sbr.rel (%p285) target = $region52
        $region51: #{tpu_custom_call.1} parent=43 // pred_region
          %288 = dma.done [#allocation6], 1024
        $region52: #{tpu_custom_call.1} parent=43 // pred_fallthru
          _
        // Predicated region
        $region53: #{tpu_custom_call.1} parent=43 // pred_check
          %p289 = pneg %p88
        $region54: #{tpu_custom_call.1} parent=43 // pred_check_branch
          %291 = sbr.rel (%p289) target = $region56
        $region55: #{tpu_custom_call.1} parent=43 // pred_region
          %292 = dma.done [#allocation6], 1024
        $region56: #{tpu_custom_call.1} parent=43 // pred_fallthru
          _
        // Predicated region
        $region57: #{tpu_custom_call.1} parent=43 // pred_check
          %p293 = pneg %p109
        $region58: #{tpu_custom_call.1} parent=43 // pred_check_branch
          %295 = sbr.rel (%p293) target = $region60
        $region59: #{tpu_custom_call.1} parent=43 // pred_region
          %296 = dma.done [#allocation9], 1024
        $region60: #{tpu_custom_call.1} parent=43 // pred_fallthru
          _
        // Predicated region
        $region61: #{tpu_custom_call.1} parent=43 // pred_check
          %p297 = pneg %p130
        $region62: #{tpu_custom_call.1} parent=43 // pred_check_branch
          %299 = sbr.rel (%p297) target = $region64
        $region63: #{tpu_custom_call.1} parent=43 // pred_region
          %300 = dma.done [#allocation9], 1024
        $region64: #{tpu_custom_call.1} parent=43 // pred_fallthru
          _
        %s301 = sand.u32 %s33, 1
        %s302 = scalar_lea.sflag [#allocation3], %s301
        %s303 = sand.u32 %s33, 1
        %s304 = smul.addr %s303, 8
        %s305 = scalar_lea.vmem [#allocation2], %s304
        %p306 = pneg %p46
        %p307 = pneg %p43
        %p308 = pneg %p67
        %p309 = pneg %p64
        %p310 = pneg %p88
        %p311 = pneg %p85
        %p312 = pneg %p109
        %p313 = pneg %p106
        %p314 = pneg %p130
        %p315 = pneg %p127
        %p316 = pneg %p151
        %p317 = pneg %p148
        %p318 = pneg %p177
        %p319 = pneg %p174
        %s320 = sand.u32 %s164, 1
        %s321 = scalar_lea.sflag [#allocation4], %s320
        %s322 = sand.u32 %s164, 1
        %s323 = smul.addr %s322, 8
        %s324 = scalar_lea.vmem [#allocation11], %s323
        %v326 = vld [vmem:[%s280] sm:$0xff]
        %v327 = vld [vmem:[%s5] sm:$0x1]
        %v328 = vld [vmem:[%s5 + $0x1] sm:$0x1]
        %v329 = vld [vmem:[%s5 + $0x2] sm:$0x1]
        %v330 = vld [vmem:[%s5 + $0x3] sm:$0x1]
        %v331 = vpack.c.bf16 %v326, %v326
        %v332 = vld [vmem:[#allocation5] sm:$0xf]
        %v333 = vld [vmem:[#allocation5 + $0x4] sm:$0xf]
        %v334 = vld [vmem:[#allocation5 + $0x8] sm:$0xf]
        %v335 = vld [vmem:[#allocation5 + $0xc] sm:$0xf]
        %v336 = vld [vmem:[#allocation5 + $0x10] sm:$0xf]
        %v337 = vld [vmem:[#allocation5 + $0x14] sm:$0xf]
        %v338 = vld [vmem:[#allocation5 + $0x18] sm:$0xf]
        %v339 = vld [vmem:[#allocation5 + $0x1c] sm:$0xf]
        %v340 = vld [vmem:[#allocation5 + $0x20] sm:$0xf]
        %v341 = vld [vmem:[#allocation5 + $0x24] sm:$0xf]
        %v342 = vld [vmem:[#allocation5 + $0x28] sm:$0xf]
        %v343 = vld [vmem:[#allocation5 + $0x2c] sm:$0xf]
        %v344 = vld [vmem:[#allocation5 + $0x30] sm:$0xf]
        %v345 = vld [vmem:[#allocation5 + $0x34] sm:$0xf]
        %v346 = vld [vmem:[#allocation5 + $0x38] sm:$0xf]
        %v347 = vld [vmem:[#allocation5 + $0x3c] sm:$0xf]
        %v348 = vlaneseq
        %v349 = vshrl.u32 %v348, 7
        %v350 = vsub.s32 0, %v349
        %v351 = vrot.slane %v327, %v350
        %v368 = vunpack.c.l.b16 %v332
        %v369 = vunpack.c.l.b16 %v333
        %v370 = vunpack.c.l.b16 %v334
        %v371 = vunpack.c.l.b16 %v335
        %v372 = vunpack.c.l.b16 %v336
        %v373 = vunpack.c.l.b16 %v337
        %v374 = vunpack.c.l.b16 %v338
        %v375 = vunpack.c.l.b16 %v339
        %v376 = vunpack.c.l.b16 %v340
        %v377 = vunpack.c.l.b16 %v341
        %v378 = vunpack.c.l.b16 %v342
        %v379 = vunpack.c.l.b16 %v343
        %v380 = vunpack.c.l.b16 %v344
        %v381 = vunpack.c.l.b16 %v345
        %v382 = vunpack.c.l.b16 %v346
        %v383 = vunpack.c.l.b16 %v347
        %v384 = vpack.c.b16 %v369, %v368
        %v385 = vpack.c.b16 %v371, %v370
        %v386 = vpack.c.b16 %v373, %v372
        %v387 = vpack.c.b16 %v375, %v374
        %v388 = vpack.c.b16 %v377, %v376
        %v389 = vpack.c.b16 %v379, %v378
        %v390 = vpack.c.b16 %v381, %v380
        %v391 = vpack.c.b16 %v383, %v382
        %400 = vmatprep.subr.bf16.mxu0 0
        %401 = vmatpush1.bf16.msra.mxu0 %v384
        %402 = vmatprep.subr.bf16.mxu0 0
        %403 = vmatpush1.bf16.msra.mxu0 %v385
        %404 = vmatprep.subr.bf16.mxu0 0
        %405 = vmatpush1.bf16.msra.mxu0 %v386
        %406 = vmatprep.subr.bf16.mxu0 0
        %407 = vmatpush1.bf16.msra.mxu0 %v387
        %408 = vmatprep.subr.bf16.mxu0 0
        %409 = vmatpush1.bf16.msra.mxu0 %v388
        %410 = vmatprep.subr.bf16.mxu0 0
        %411 = vmatpush1.bf16.msra.mxu0 %v389
        %412 = vmatprep.subr.bf16.mxu0 0
        %413 = vmatpush1.bf16.msra.mxu0 %v390
        %414 = vmatprep.subr.bf16.mxu0 0
        %415 = vmatpush1.bf16.msra.mxu0 %v391
        %416 = vmatprep.subr.bf16.mxu0 0
        %417 = vmatpush1.bf16.msra.mxu0 0
        %418 = vmatprep.subr.bf16.mxu0 0
        %419 = vmatpush1.bf16.msra.mxu0 0
        %420 = vmatprep.subr.bf16.mxu0 0
        %421 = vmatpush1.bf16.msra.mxu0 0
        %422 = vmatprep.subr.bf16.mxu0 0
        %423 = vmatpush1.bf16.msra.mxu0 0
        %424 = vmatprep.subr.bf16.mxu0 0
        %425 = vmatpush1.bf16.msra.mxu0 0
        %426 = vmatprep.subr.bf16.mxu0 0
        %427 = vmatpush1.bf16.msra.mxu0 0
        %428 = vmatprep.subr.bf16.mxu0 0
        %429 = vmatpush1.bf16.msra.mxu0 0
        %430 = vmatprep.subr.bf16.mxu0 0
        %431 = vmatpush1.bf16.msra.mxu0 0
        %432 = vmatprep.mubr.bf16.mxu0 0
        %433 = vmatmul.mubr.bf16.gmra.mrb[0].mxu0 %v331
        %v434 = vpop.f32.mrb[0].mxu0
        %v435 = vadd.f32 %v351, %v434
        %v436 = vpop.f32.mrb[0].mxu0
        %v437 = vpop.f32.mrb[0].mxu0
        %v438 = vpop.f32.mrb[0].mxu0
        %439 = vdwg.mxu0
        %v440 = vmax.f32 %v435, 0.0
        %v441 = vpack.c.bf16 %v440, %v440
        %v442 = vld [vmem:[#allocation7] sm:$0xf]
        %v443 = vld [vmem:[#allocation7 + $0x4] sm:$0xf]
        %v444 = vld [vmem:[#allocation7 + $0x8] sm:$0xf]
        %v445 = vld [vmem:[#allocation7 + $0xc] sm:$0xf]
        %v446 = vld [vmem:[#allocation7 + $0x10] sm:$0xf]
        %v447 = vld [vmem:[#allocation7 + $0x14] sm:$0xf]
        %v448 = vld [vmem:[#allocation7 + $0x18] sm:$0xf]
        %v449 = vld [vmem:[#allocation7 + $0x1c] sm:$0xf]
        %v450 = vld [vmem:[#allocation7 + $0x20] sm:$0xf]
        %v451 = vld [vmem:[#allocation7 + $0x24] sm:$0xf]
        %v452 = vld [vmem:[#allocation7 + $0x28] sm:$0xf]
        %v453 = vld [vmem:[#allocation7 + $0x2c] sm:$0xf]
        %v454 = vld [vmem:[#allocation7 + $0x30] sm:$0xf]
        %v455 = vld [vmem:[#allocation7 + $0x34] sm:$0xf]
        %v456 = vld [vmem:[#allocation7 + $0x38] sm:$0xf]
        %v457 = vld [vmem:[#allocation7 + $0x3c] sm:$0xf]
        %v458 = vlaneseq
        %v459 = vshrl.u32 %v458, 7
        %v460 = vsub.s32 0, %v459
        %v461 = vrot.slane %v328, %v460
        %v478 = vunpack.c.l.b16 %v442
        %v479 = vunpack.c.l.b16 %v443
        %v480 = vunpack.c.l.b16 %v444
        %v481 = vunpack.c.l.b16 %v445
        %v482 = vunpack.c.l.b16 %v446
        %v483 = vunpack.c.l.b16 %v447
        %v484 = vunpack.c.l.b16 %v448
        %v485 = vunpack.c.l.b16 %v449
        %v486 = vunpack.c.l.b16 %v450
        %v487 = vunpack.c.l.b16 %v451
        %v488 = vunpack.c.l.b16 %v452
        %v489 = vunpack.c.l.b16 %v453
        %v490 = vunpack.c.l.b16 %v454
        %v491 = vunpack.c.l.b16 %v455
        %v492 = vunpack.c.l.b16 %v456
        %v493 = vunpack.c.l.b16 %v457
        %v494 = vpack.c.b16 %v479, %v478
        %v495 = vpack.c.b16 %v481, %v480
        %v496 = vpack.c.b16 %v483, %v482
        %v497 = vpack.c.b16 %v485, %v484
        %v498 = vpack.c.b16 %v487, %v486
        %v499 = vpack.c.b16 %v489, %v488
        %v500 = vpack.c.b16 %v491, %v490
        %v501 = vpack.c.b16 %v493, %v492
        %510 = vmatprep.subr.bf16.mxu0 0
        %511 = vmatpush1.bf16.msra.mxu0 %v494
        %512 = vmatprep.subr.bf16.mxu0 0
        %513 = vmatpush1.bf16.msra.mxu0 %v495
        %514 = vmatprep.subr.bf16.mxu0 0
        %515 = vmatpush1.bf16.msra.mxu0 %v496
        %516 = vmatprep.subr.bf16.mxu0 0
        %517 = vmatpush1.bf16.msra.mxu0 %v497
        %518 = vmatprep.subr.bf16.mxu0 0
        %519 = vmatpush1.bf16.msra.mxu0 %v498
        %520 = vmatprep.subr.bf16.mxu0 0
        %521 = vmatpush1.bf16.msra.mxu0 %v499
        %522 = vmatprep.subr.bf16.mxu0 0
        %523 = vmatpush1.bf16.msra.mxu0 %v500
        %524 = vmatprep.subr.bf16.mxu0 0
        %525 = vmatpush1.bf16.msra.mxu0 %v501
        %526 = vmatprep.subr.bf16.mxu0 0
        %527 = vmatpush1.bf16.msra.mxu0 0
        %528 = vmatprep.subr.bf16.mxu0 0
        %529 = vmatpush1.bf16.msra.mxu0 0
        %530 = vmatprep.subr.bf16.mxu0 0
        %531 = vmatpush1.bf16.msra.mxu0 0
        %532 = vmatprep.subr.bf16.mxu0 0
        %533 = vmatpush1.bf16.msra.mxu0 0
        %534 = vmatprep.subr.bf16.mxu0 0
        %535 = vmatpush1.bf16.msra.mxu0 0
        %536 = vmatprep.subr.bf16.mxu0 0
        %537 = vmatpush1.bf16.msra.mxu0 0
        %538 = vmatprep.subr.bf16.mxu0 0
        %539 = vmatpush1.bf16.msra.mxu0 0
        %540 = vmatprep.subr.bf16.mxu0 0
        %541 = vmatpush1.bf16.msra.mxu0 0
        %542 = vmatprep.mubr.bf16.mxu0 0
        %543 = vmatmul.mubr.bf16.gmra.mrb[0].mxu0 %v441
        %v544 = vpop.f32.mrb[0].mxu0
        %v545 = vadd.f32 %v461, %v544
        %v546 = vpop.f32.mrb[0].mxu0
        %v547 = vpop.f32.mrb[0].mxu0
        %v548 = vpop.f32.mrb[0].mxu0
        %549 = vdwg.mxu0
        %v550 = vmul.f32 %v545, %v545
        %551 = vadd.xlane.f32.xlu0 %v550
        %v552 = vpop.xlane.xlu0 %551
        %v553 = vmax.f32 %v552, 1e-24
        %v554 = vrsqrt.pop %v553
        %v555 = vmul.f32 %v545, %v554
        %v556 = vlaneseq
        %v557 = vshrl.u32 %v556, 7
        %v558 = vsub.s32 0, %v557
        %v559 = vrot.slane %v329, %v558
        %v560 = vmul.f32 %v555, %v559
        %v561 = vlaneseq
        %v562 = vshrl.u32 %v561, 7
        %v563 = vsub.s32 0, %v562
        %v564 = vrot.slane %v330, %v563
        %v565 = vadd.f32 %v560, %v564
        %vm566 = vcmp.ge.f32.partialorder %v565, 0.0
        %v567 = vmul.f32 %v565, 0.01
        %v568 = vsel %vm566, %v565, %v567
        %v569 = vand.u32 2147483647, %v568
        %570 = vmax.xlane.f32.xlu0 %v569
        %v571 = vpop.xlane.xlu0 %570
        %v572 = vrcp.pop %v571
        %v573 = vmul.f32 %v569, %v572
        %v574 = vld [vmem:[%s5 + $0x4] sm:$0x1]
        %v575 = vld [vmem:[%s5 + $0x5] sm:$0x1]
        %v576 = vld [vmem:[%s5 + $0x6] sm:$0x1]
        %v577 = vld [vmem:[%s5 + $0x7] sm:$0x1]
        %v578 = vpack.c.bf16 %v573, %v573
        %v579 = vld [vmem:[#allocation8] sm:$0xf]
        %v580 = vld [vmem:[#allocation8 + $0x4] sm:$0xf]
        %v581 = vld [vmem:[#allocation8 + $0x8] sm:$0xf]
        %v582 = vld [vmem:[#allocation8 + $0xc] sm:$0xf]
        %v583 = vld [vmem:[#allocation8 + $0x10] sm:$0xf]
        %v584 = vld [vmem:[#allocation8 + $0x14] sm:$0xf]
        %v585 = vld [vmem:[#allocation8 + $0x18] sm:$0xf]
        %v586 = vld [vmem:[#allocation8 + $0x1c] sm:$0xf]
        %v587 = vld [vmem:[#allocation8 + $0x20] sm:$0xf]
        %v588 = vld [vmem:[#allocation8 + $0x24] sm:$0xf]
        %v589 = vld [vmem:[#allocation8 + $0x28] sm:$0xf]
        %v590 = vld [vmem:[#allocation8 + $0x2c] sm:$0xf]
        %v591 = vld [vmem:[#allocation8 + $0x30] sm:$0xf]
        %v592 = vld [vmem:[#allocation8 + $0x34] sm:$0xf]
        %v593 = vld [vmem:[#allocation8 + $0x38] sm:$0xf]
        %v594 = vld [vmem:[#allocation8 + $0x3c] sm:$0xf]
        %v595 = vlaneseq
        %v596 = vshrl.u32 %v595, 7
        %v597 = vsub.s32 0, %v596
        %v598 = vrot.slane %v574, %v597
        %v615 = vunpack.c.l.b16 %v579
        %v616 = vunpack.c.l.b16 %v580
        %v617 = vunpack.c.l.b16 %v581
        %v618 = vunpack.c.l.b16 %v582
        %v619 = vunpack.c.l.b16 %v583
        %v620 = vunpack.c.l.b16 %v584
        %v621 = vunpack.c.l.b16 %v585
        %v622 = vunpack.c.l.b16 %v586
        %v623 = vunpack.c.l.b16 %v587
        %v624 = vunpack.c.l.b16 %v588
        %v625 = vunpack.c.l.b16 %v589
        %v626 = vunpack.c.l.b16 %v590
        %v627 = vunpack.c.l.b16 %v591
        %v628 = vunpack.c.l.b16 %v592
        %v629 = vunpack.c.l.b16 %v593
        %v630 = vunpack.c.l.b16 %v594
        %v631 = vpack.c.b16 %v616, %v615
        %v632 = vpack.c.b16 %v618, %v617
        %v633 = vpack.c.b16 %v620, %v619
        %v634 = vpack.c.b16 %v622, %v621
        %v635 = vpack.c.b16 %v624, %v623
        %v636 = vpack.c.b16 %v626, %v625
        %v637 = vpack.c.b16 %v628, %v627
        %v638 = vpack.c.b16 %v630, %v629
        %647 = vmatprep.subr.bf16.mxu0 0
        %648 = vmatpush1.bf16.msra.mxu0 %v631
        %649 = vmatprep.subr.bf16.mxu0 0
        %650 = vmatpush1.bf16.msra.mxu0 %v632
        %651 = vmatprep.subr.bf16.mxu0 0
        %652 = vmatpush1.bf16.msra.mxu0 %v633
        %653 = vmatprep.subr.bf16.mxu0 0
        %654 = vmatpush1.bf16.msra.mxu0 %v634
        %655 = vmatprep.subr.bf16.mxu0 0
        %656 = vmatpush1.bf16.msra.mxu0 %v635
        %657 = vmatprep.subr.bf16.mxu0 0
        %658 = vmatpush1.bf16.msra.mxu0 %v636
        %659 = vmatprep.subr.bf16.mxu0 0
        %660 = vmatpush1.bf16.msra.mxu0 %v637
        %661 = vmatprep.subr.bf16.mxu0 0
        %662 = vmatpush1.bf16.msra.mxu0 %v638
        %663 = vmatprep.subr.bf16.mxu0 0
        %664 = vmatpush1.bf16.msra.mxu0 0
        %665 = vmatprep.subr.bf16.mxu0 0
        %666 = vmatpush1.bf16.msra.mxu0 0
        %667 = vmatprep.subr.bf16.mxu0 0
        %668 = vmatpush1.bf16.msra.mxu0 0
        %669 = vmatprep.subr.bf16.mxu0 0
        %670 = vmatpush1.bf16.msra.mxu0 0
        %671 = vmatprep.subr.bf16.mxu0 0
        %672 = vmatpush1.bf16.msra.mxu0 0
        %673 = vmatprep.subr.bf16.mxu0 0
        %674 = vmatpush1.bf16.msra.mxu0 0
        %675 = vmatprep.subr.bf16.mxu0 0
        %676 = vmatpush1.bf16.msra.mxu0 0
        %677 = vmatprep.subr.bf16.mxu0 0
        %678 = vmatpush1.bf16.msra.mxu0 0
        %679 = vmatprep.mubr.bf16.mxu0 0
        %680 = vmatmul.mubr.bf16.gmra.mrb[0].mxu0 %v578
        %v681 = vpop.f32.mrb[0].mxu0
        %v682 = vadd.f32 %v598, %v681
        %v683 = vpop.f32.mrb[0].mxu0
        %v684 = vpop.f32.mrb[0].mxu0
        %v685 = vpop.f32.mrb[0].mxu0
        %686 = vdwg.mxu0
        %v687 = vmax.f32 %v682, 0.0
        %v688 = vpack.c.bf16 %v687, %v687
        %v689 = vld [vmem:[#allocation10] sm:$0xf]
        %v690 = vld [vmem:[#allocation10 + $0x4] sm:$0xf]
        %v691 = vld [vmem:[#allocation10 + $0x8] sm:$0xf]
        %v692 = vld [vmem:[#allocation10 + $0xc] sm:$0xf]
        %v693 = vld [vmem:[#allocation10 + $0x10] sm:$0xf]
        %v694 = vld [vmem:[#allocation10 + $0x14] sm:$0xf]
        %v695 = vld [vmem:[#allocation10 + $0x18] sm:$0xf]
        %v696 = vld [vmem:[#allocation10 + $0x1c] sm:$0xf]
        %v697 = vld [vmem:[#allocation10 + $0x20] sm:$0xf]
        %v698 = vld [vmem:[#allocation10 + $0x24] sm:$0xf]
        %v699 = vld [vmem:[#allocation10 + $0x28] sm:$0xf]
        %v700 = vld [vmem:[#allocation10 + $0x2c] sm:$0xf]
        %v701 = vld [vmem:[#allocation10 + $0x30] sm:$0xf]
        %v702 = vld [vmem:[#allocation10 + $0x34] sm:$0xf]
        %v703 = vld [vmem:[#allocation10 + $0x38] sm:$0xf]
        %v704 = vld [vmem:[#allocation10 + $0x3c] sm:$0xf]
        %v705 = vlaneseq
        %v706 = vshrl.u32 %v705, 7
        %v707 = vsub.s32 0, %v706
        %v708 = vrot.slane %v575, %v707
        %v725 = vunpack.c.l.b16 %v689
        %v726 = vunpack.c.l.b16 %v690
        %v727 = vunpack.c.l.b16 %v691
        %v728 = vunpack.c.l.b16 %v692
        %v729 = vunpack.c.l.b16 %v693
        %v730 = vunpack.c.l.b16 %v694
        %v731 = vunpack.c.l.b16 %v695
        %v732 = vunpack.c.l.b16 %v696
        %v733 = vunpack.c.l.b16 %v697
        %v734 = vunpack.c.l.b16 %v698
        %v735 = vunpack.c.l.b16 %v699
        %v736 = vunpack.c.l.b16 %v700
        %v737 = vunpack.c.l.b16 %v701
        %v738 = vunpack.c.l.b16 %v702
        %v739 = vunpack.c.l.b16 %v703
        %v740 = vunpack.c.l.b16 %v704
        %v741 = vpack.c.b16 %v726, %v725
        %v742 = vpack.c.b16 %v728, %v727
        %v743 = vpack.c.b16 %v730, %v729
        %v744 = vpack.c.b16 %v732, %v731
        %v745 = vpack.c.b16 %v734, %v733
        %v746 = vpack.c.b16 %v736, %v735
        %v747 = vpack.c.b16 %v738, %v737
        %v748 = vpack.c.b16 %v740, %v739
        %757 = vmatprep.subr.bf16.mxu0 0
        %758 = vmatpush1.bf16.msra.mxu0 %v741
        %759 = vmatprep.subr.bf16.mxu0 0
        %760 = vmatpush1.bf16.msra.mxu0 %v742
        %761 = vmatprep.subr.bf16.mxu0 0
        %762 = vmatpush1.bf16.msra.mxu0 %v743
        %763 = vmatprep.subr.bf16.mxu0 0
        %764 = vmatpush1.bf16.msra.mxu0 %v744
        %765 = vmatprep.subr.bf16.mxu0 0
        %766 = vmatpush1.bf16.msra.mxu0 %v745
        %767 = vmatprep.subr.bf16.mxu0 0
        %768 = vmatpush1.bf16.msra.mxu0 %v746
        %769 = vmatprep.subr.bf16.mxu0 0
        %770 = vmatpush1.bf16.msra.mxu0 %v747
        %771 = vmatprep.subr.bf16.mxu0 0
        %772 = vmatpush1.bf16.msra.mxu0 %v748
        %773 = vmatprep.subr.bf16.mxu0 0
        %774 = vmatpush1.bf16.msra.mxu0 0
        %775 = vmatprep.subr.bf16.mxu0 0
        %776 = vmatpush1.bf16.msra.mxu0 0
        %777 = vmatprep.subr.bf16.mxu0 0
        %778 = vmatpush1.bf16.msra.mxu0 0
        %779 = vmatprep.subr.bf16.mxu0 0
        %780 = vmatpush1.bf16.msra.mxu0 0
        %781 = vmatprep.subr.bf16.mxu0 0
        %782 = vmatpush1.bf16.msra.mxu0 0
        %783 = vmatprep.subr.bf16.mxu0 0
        %784 = vmatpush1.bf16.msra.mxu0 0
        %785 = vmatprep.subr.bf16.mxu0 0
        %786 = vmatpush1.bf16.msra.mxu0 0
        %787 = vmatprep.subr.bf16.mxu0 0
        %788 = vmatpush1.bf16.msra.mxu0 0
        %789 = vmatprep.mubr.bf16.mxu0 0
        %790 = vmatmul.mubr.bf16.gmra.mrb[0].mxu0 %v688
        %v791 = vpop.f32.mrb[0].mxu0
        %v792 = vadd.f32 %v708, %v791
        %v793 = vpop.f32.mrb[0].mxu0
        %v794 = vpop.f32.mrb[0].mxu0
        %v795 = vpop.f32.mrb[0].mxu0
        %796 = vdwg.mxu0
        %v797 = vmul.f32 %v792, %v792
        %798 = vadd.xlane.f32.xlu0 %v797
        %v799 = vpop.xlane.xlu0 %798
        %v800 = vmax.f32 %v799, 1e-24
        %v801 = vrsqrt.pop %v800
        %v802 = vmul.f32 %v792, %v801
        %v803 = vlaneseq
        %v804 = vshrl.u32 %v803, 7
        %v805 = vsub.s32 0, %v804
        %v806 = vrot.slane %v576, %v805
        %v807 = vmul.f32 %v802, %v806
        %v808 = vlaneseq
        %v809 = vshrl.u32 %v808, 7
        %v810 = vsub.s32 0, %v809
        %v811 = vrot.slane %v577, %v810
        %v812 = vadd.f32 %v807, %v811
        %813 = vst [vmem:[%s324] sm:$0xff] %v812
        %s814 = sand.u32 %s164, 1
        %s815 = scalar_lea.sflag [#allocation4], %s814
        %s816 = sand.u32 %s164, 1
        %s817 = smul.addr %s816, 8
        %s818 = scalar_lea.vmem [#allocation11], %s817
        // Predicated region
        $region65: #{tpu_custom_call.1} parent=43 // pred_check
          %p819 = pneg %p174
        $region66: #{tpu_custom_call.1} parent=43 // pred_check_branch
          %821 = sbr.rel (%p819) target = $region68
        $region67: #{tpu_custom_call.1} parent=43 // pred_region
          %s823 = ssub.s32 128, 128
          %824 = vsyncadd %s815, %s823
          %s825 = smul.addr %s25, 128
          %s826 = scalar_lea.hbm %s6, %s825
          %s828 = sshll.u32 %s818, 4
          %s829 = int_to_ptr.vmem [resolvable:$true] %s828
          %831 = dma.vmem_to_hbm [thread:$0]  %s829, 128, %s826, %s815
        $region68: #{tpu_custom_call.1} parent=43 // pred_fallthru
          _
      $region44: #{tpu_custom_call.1} parent=5 // pred_fallthru
        _
      %p832 = scmp.le.s32.totalorder 2, %s20
      // Predicated region
      $region69: #{tpu_custom_call.1} parent=5 // pred_check
        %p833 = pneg %p832
      $region70: #{tpu_custom_call.1} parent=5 // pred_check_branch
        %835 = sbr.rel (%p833) target = $region72
      $region71: #{tpu_custom_call.1} parent=5 // pred_region
        %s836 = ssub.s32 %s20, 2
        // Predicated region
        $region73: #{tpu_custom_call.1} parent=71 // pred_check
          %p837 = pneg %p180
        $region74: #{tpu_custom_call.1} parent=71 // pred_check_branch
          %839 = sbr.rel (%p837) target = $region76
        $region75: #{tpu_custom_call.1} parent=71 // pred_region
          %s840 = sand.u32 %s165, 1
          %s841 = scalar_lea.sflag [#allocation4], %s840
          %s842 = sand.u32 %s165, 1
          %s843 = smul.addr %s842, 8
          %s844 = scalar_lea.vmem [#allocation11], %s843
          %845 = dma.done %s841, 128
        $region76: #{tpu_custom_call.1} parent=71 // pred_fallthru
          _
      $region72: #{tpu_custom_call.1} parent=5 // pred_fallthru
        _
    $region6: #{tpu_custom_call.1} parent=1 // loop_footer
      %s24 = sadd.s32 1, %s20
    $region7: #{tpu_custom_call.1} parent=1 // loop_footer_branch
      %19 = sbr.rel target = $region3
    $region8: #{tpu_custom_call.1} parent=1 // loop_exit
      _
    %846 = vsyncpa [#allocation3], 1
    %s847 = scalar_lea.sflag [#allocation3], 1
    %848 = vsyncpa %s847, 1
    %849 = vsyncpa [#allocation6], 1
    %850 = vsyncpa [#allocation9], 1
    %851 = vsyncpa [#allocation4], 1
    %s852 = scalar_lea.sflag [#allocation4], 1
    %853 = vsyncpa %s852, 1

</llo_original>
